<compile_context>
chip_gen: v7x
topology: tpu7x:2x2x1
jax: 0.10.0
libtpu: 0.0.40
codegen_flags: <defaults>
</compile_context>

<pallas_src>
import functools

import jax
import jax.numpy as jnp
from jax.experimental import pallas as pl
from jax.experimental.pallas import tpu as pltpu


def _actor_kernel(theta_ref, x_ref, out_ref, *, f, inv_f):
    # x[x == 0] = -1
    x = x_ref[...]
    x = jnp.where(x == 0.0, -1.0, x)

    theta = theta_ref[0]                       # scalar from SMEM
    z = theta * x
    # sigmoid(z) == 0.5 * tanh(z/2) + 0.5 : a single EUP op per element.
    p = 0.5 * jnp.tanh(0.5 * z) + 0.5

    # Categorical normalizer over the concatenated (p, 1-p) axis is exactly f,
    # so normalize with the compile-time constant 1/f: no reduction, no divide.
    # Both sub-stores are lane-aligned (f % 128 == 0) -> unmasked vst.
    out_ref[:, :f] = p * inv_f
    out_ref[:, f:] = (1.0 - p) * inv_f


def _pure_jax_forward(theta, x):
    """Exact PyTorch-semantics forward in plain JAX (small-shape path / reference)."""
    x = x.astype(jnp.float32)
    x = jnp.where(x == 0.0, -1.0, x)
    p = jax.nn.sigmoid(theta.astype(jnp.float32)[0] * x)
    axis = 0 if x.shape[0] == 1 else 1         # torch keys on shape[0], not ndim
    dist = jnp.concatenate([p, 1.0 - p], axis=axis)
    return dist / jnp.sum(dist, axis=-1, keepdims=True)


def actor_forward(theta, x, *, min_kernel_elems=1 << 16):
    """Returns (categorical_probs, theta), mirroring Actor.forward.

    theta: (1,) float32 parameter.
    x:     (B, F) game states, or 1-D (1,) for the single-state path.
    """
    # TODO(synk): the `if torch.isnan(self.theta): re-init parameter` branch is
    # host-side parameter mutation (and the Adam optimizer is training state);
    # neither is part of the numeric forward pass implemented here.
    theta = theta.astype(jnp.float32)

    use_kernel = (
        x.ndim == 2
        and x.shape[0] > 1                      # shape[0]==1 concatenates on dim 0
        and x.shape[1] % 128 == 0               # lane-dense fused output
        and x.shape[0] * x.shape[1] >= min_kernel_elems
    )
    if not use_kernel:
        # Tiny / non-lane-aligned problems: pallas_call launch overhead dwarfs
        # the handful of flops -> fused XLA elementwise path.
        return _pure_jax_forward(theta, x), theta

    x = x.astype(jnp.float32)
    B, F = x.shape

    # Batch tile: biggest block whose (input + fused output) double-buffered
    # footprint stays under ~8 MiB (safe on v5e/v6e/v7x scoped-VMEM defaults),
    # capped so the grid has >= ~4 steps -> DMA/compute pipelining and megacore
    # sharding of the "parallel" batch axis on v7x.
    budget = 8 * 1024 * 1024
    bytes_per_row = 2 * (4 * F + 8 * F)        # (x block + (p,1-p) block) * 2 buffers
    tb = max(8, min(1024, (budget // bytes_per_row) // 8 * 8))
    tb = min(tb, max(8, ((pl.cdiv(B, 4) + 7) // 8) * 8))
    grid = (pl.cdiv(B, tb),)                   # ragged last block handled by Pallas

    kernel = functools.partial(_actor_kernel, f=F, inv_f=1.0 / F)

    probs = pl.pallas_call(
        kernel,
        grid=grid,
        out_shape=jax.ShapeDtypeStruct((B, 2 * F), jnp.float32),
        in_specs=[
            pl.BlockSpec(memory_space=pltpu.MemorySpace.SMEM),   # theta (1,)
            pl.BlockSpec((tb, F), lambda i: (i, 0)),             # x block
        ],
        out_specs=pl.BlockSpec((tb, 2 * F), lambda i: (i, 0)),   # fused (p, 1-p)/F
        compiler_params=pltpu.CompilerParams(
            dimension_semantics=("parallel",)),
        cost_estimate=pl.CostEstimate(
            flops=5 * B * F,
            transcendentals=B * F,
            bytes_accessed=12 * B * F),
    )(theta, x)

    return probs, theta


if __name__ == "__main__":
    key = jax.random.PRNGKey(0)
    k_theta, k_x = jax.random.split(key)

    # torch.randn(1)-equivalent deterministic parameter init.
    theta = jax.random.normal(k_theta, (1,), dtype=jnp.float32)

    # Batched binary game states (zeros remapped to -1 inside the kernel),
    # sized to take the tiled Pallas path (>= min_kernel_elems, F % 128 == 0).
    B, F = 1024, 128
    x = jax.random.randint(k_x, (B, F), 0, 2).astype(jnp.float32)

    probs, theta_out = actor_forward(theta, x)
    probs = jax.block_until_ready(probs)
    ref = _pure_jax_forward(theta, x)
    assert probs.shape == (B, 2 * F)
    assert jnp.allclose(probs, ref, atol=1e-5), float(jnp.max(jnp.abs(probs - ref)))

    # Batch that does not divide the tile -> ragged last grid block (no pad/slice).
    B2 = 520
    x_r = jax.random.randint(jax.random.PRNGKey(1), (B2, F), 0, 2).astype(jnp.float32)
    probs_r, _ = actor_forward(theta, x_r)
    probs_r = jax.block_until_ready(probs_r)
    assert probs_r.shape == (B2, 2 * F)
    assert jnp.allclose(probs_r, _pure_jax_forward(theta, x_r), atol=1e-5)

    # Tiny shapes of the original agent loop (pure-JAX fast path).
    x_small = jnp.array([[1.0], [0.0]], dtype=jnp.float32)      # (2, 1)
    probs_s, _ = actor_forward(theta, x_small)
    probs_s = jax.block_until_ready(probs_s)
    assert probs_s.shape == (2, 2)
    assert jnp.allclose(probs_s, _pure_jax_forward(theta, x_small), atol=1e-6)

    x_single = jnp.array([0.0], dtype=jnp.float32)              # 1-D single state
    probs_1, _ = actor_forward(theta, x_single)
    probs_1 = jax.block_until_ready(probs_1)
    assert probs_1.shape == (2,)
    assert jnp.allclose(probs_1, _pure_jax_forward(theta, x_single), atol=1e-6)

    print("KERNEL_OK")
</pallas_src>

<mosaic_0001>
module attributes {stable_mosaic.version = 11 : i64} {
  func.func @_actor_kernel(%arg0: i32, %arg1: memref<1xf32, #tpu.memory_space<smem>>, %arg2: memref<256x128xf32, #tpu.memory_space<vmem>>, %arg3: memref<256x256xf32, #tpu.memory_space<vmem>>) attributes {dimension_semantics = [#tpu.dimension_semantics<parallel>], iteration_bounds = array<i64: 4>, scalar_prefetch = 0 : i64, scratch_operands = 0 : i64, tpu.core_type = #tpu.core_type<tc>, window_params = [{transform_indices = @transform_0, window_bounds = array<i64: 1>}, {transform_indices = @transform_1, window_bounds = array<i64: 256, 128>}, {transform_indices = @transform_2, window_bounds = array<i64: 256, 256>}]} {
    %c0 = arith.constant 0 : index
    %c0_0 = arith.constant 0 : index
    %0 = vector.load %arg2[%c0, %c0_0] : memref<256x128xf32, #tpu.memory_space<vmem>>, vector<256x128xf32>
    %cst = arith.constant 0.000000e+00 : f32
    %1 = vector.broadcast %cst : f32 to vector<256x128xf32>
    %2 = arith.cmpf oeq, %0, %1 : vector<256x128xf32>
    %cst_1 = arith.constant -1.000000e+00 : f32
    %3 = vector.broadcast %cst_1 : f32 to vector<256x128xf32>
    %4 = arith.select %2, %3, %0 : vector<256x128xi1>, vector<256x128xf32>
    %c0_2 = arith.constant 0 : index
    %5 = memref.load %arg1[%c0_2] : memref<1xf32, #tpu.memory_space<smem>>
    %6 = vector.broadcast %5 : f32 to vector<256x128xf32>
    %7 = arith.mulf %6, %4 : vector<256x128xf32>
    %cst_3 = arith.constant 5.000000e-01 : f32
    %8 = vector.broadcast %cst_3 : f32 to vector<256x128xf32>
    %9 = arith.mulf %8, %7 : vector<256x128xf32>
    %10 = math.tanh %9 : vector<256x128xf32>
    %cst_4 = arith.constant 5.000000e-01 : f32
    %11 = vector.broadcast %cst_4 : f32 to vector<256x128xf32>
    %12 = arith.mulf %11, %10 : vector<256x128xf32>
    %cst_5 = arith.constant 5.000000e-01 : f32
    %13 = vector.broadcast %cst_5 : f32 to vector<256x128xf32>
    %14 = arith.addf %12, %13 : vector<256x128xf32>
    %cst_6 = arith.constant 7.812500e-03 : f32
    %15 = vector.broadcast %cst_6 : f32 to vector<256x128xf32>
    %16 = arith.mulf %14, %15 : vector<256x128xf32>
    %c0_7 = arith.constant 0 : index
    %c0_8 = arith.constant 0 : index
    %17 = vector.load %arg3[%c0_7, %c0_8] : memref<256x256xf32, #tpu.memory_space<vmem>>, vector<256x128xf32>
    tpu.vector_store %arg3[%c0_7, %c0_8], %16 {strides = array<i32>} : memref<256x256xf32, #tpu.memory_space<vmem>>, vector<256x128xf32>,
    %cst_9 = arith.constant 1.000000e+00 : f32
    %18 = vector.broadcast %cst_9 : f32 to vector<256x128xf32>
    %19 = arith.subf %18, %14 : vector<256x128xf32>
    %cst_10 = arith.constant 7.812500e-03 : f32
    %20 = vector.broadcast %cst_10 : f32 to vector<256x128xf32>
    %21 = arith.mulf %19, %20 : vector<256x128xf32>
    %c0_11 = arith.constant 0 : index
    %c128 = arith.constant 128 : index
    %22 = vector.load %arg3[%c0_11, %c128] : memref<256x256xf32, #tpu.memory_space<vmem>>, vector<256x128xf32>
    tpu.vector_store %arg3[%c0_11, %c128], %21 {strides = array<i32>} : memref<256x256xf32, #tpu.memory_space<vmem>>, vector<256x128xf32>,
    return
  }
  func.func @transform_0(%arg0: i32) -> i32 {
    %c0_i32 = arith.constant 0 : i32
    %c0_i32_0 = arith.constant 0 : i32
    return %c0_i32 : i32
  }
  func.func @transform_1(%arg0: i32) -> (i32, i32) {
    %c0_i32 = arith.constant 0 : i32
    %c0_i32_0 = arith.constant 0 : i32
    return %arg0, %c0_i32 : i32, i32
  }
  func.func @transform_2(%arg0: i32) -> (i32, i32) {
    %c0_i32 = arith.constant 0 : i32
    %c0_i32_0 = arith.constant 0 : i32
    return %arg0, %c0_i32 : i32, i32
  }
}

</mosaic_0001>

<llo_original>
// kernel: tpu_custom_call.1
$region0: #{tpu_custom_call.1}
  #allocation0 [shape = 'u32[]', space=smem, size = 0x4, offset = 0x4, fixed_abs, tag = 'smem constant byte address 0x4 - core index']
  #allocation1 [shape = 'u32[144,128]{1,0:T(1,128)}', space=vmem, size = 0x12000, scoped, tag = 'internal scratch']
  #allocation2 [shape = 'f32[1]{0:T(128)S(6)}', space=smem, size = 0x200, scoped, tag = 'scoped memory for tpu_custom_call.1']
  %s0 = inlined_call_operand.<no memory space> [shape: f32[1], index: 0, kind: input, shape index: {}]
  %s1 = inlined_call_operand.hbm [shape: f32[1024,128], index: 1, kind: input, shape index: {}]
  %s2 = inlined_call_operand.hbm [shape: f32[1024,256], index: 2, kind: output, shape index: {}]
  %s3 = sld [smem:[#allocation0]]
  $region45: #{tpu_custom_call.1} parent=0
    _
  %s5 = ssub.s32 1, %s3
  %s6 = scalar_select 0, %s5, %s3
  %7 = sst [smem:[#allocation2]] %s0
  $region1: #{tpu_custom_call.1} parent=0
    #allocation3 [shape = 'u8[262144]{0}', space=vmem, size = 0x40000, scoped, tag = 'input window, operand 1']
    #allocation4 [shape = 's32[2]{0}', space=sflag, size = 0x8, scoped, tag = 'scoped memory for tpu_custom_call.1']
    #allocation5 [shape = 's32[2]{0}', space=sflag, size = 0x8, scoped, tag = 'scoped memory for tpu_custom_call.1']
    #allocation6 [shape = 'u8[524288]{0}', space=vmem, size = 0x80000, scoped, tag = 'output window, operand 0']
    %8 = vsyncpa [#allocation4], 0
    %s9 = scalar_lea.sflag [#allocation4], 1
    %10 = vsyncpa %s9, 0
    %11 = vsyncpa [#allocation5], 0
    %s12 = scalar_lea.sflag [#allocation5], 1
    %13 = vsyncpa %s12, 0
    loop: start=0, step=1, limit=6
    $region2: #{tpu_custom_call.1} parent=1 // loop_pre_header
      _
    $region3: #{tpu_custom_call.1} parent=1 // loop_header
      %s15 = sphi 0, %s19
      %p16 = scmp.ge.s32.totalorder %s15, 6
      %s23 = sphi 0, %s23
      %s25 = sphi 0, %s23
      %s26 = sphi 0, %s25
      %s40 = sphi 0, %s26
      %s46 = sphi 0, %s48
      %s49 = sphi 0, %s46
      %s50 = sphi 0, %s49
      %s66 = sphi 0, %s50
      %s72 = sphi 0, %s74
      %s75 = sphi 0, %s72
      %s76 = sphi 0, %s75
      %s92 = sphi 0, %s76
    $region4: #{tpu_custom_call.1} parent=1 // loop_header_branch
      %18 = sbr.rel (%p16) target = $region8
    $region5: #{tpu_custom_call.1} parent=1 // loop_body
      %s20 = ssub.s32 %s15, 1
      %s21 = ssub.s32 %s15, 2
      %s22 = sadd.s32 %s15, 1
      %s24 = sadd.s32 %s23, 1
      %p27 = scmp.eq.s32.totalorder %s15, 3
      %p28 = scmp.ne.s32.totalorder %s23, %s25
      %p29 = scmp.eq.s32.totalorder %s15, 0
      %p30 = por %p28, %p29
      %p31 = scmp.ne.s32.totalorder %s23, %s25
      %p32 = scmp.eq.s32.totalorder %s20, 3
      %p33 = por %p31, %p32
      %p34 = scmp.ne.s32.totalorder %s25, %s26
      %p35 = scmp.eq.s32.totalorder %s20, 0
      %p36 = por %p34, %p35
      %p37 = scmp.ne.s32.totalorder %s25, %s26
      %p38 = scmp.eq.s32.totalorder %s21, 3
      %p39 = por %p37, %p38
      %p41 = scmp.ne.s32.totalorder %s26, %s40
      %p42 = scmp.eq.s32.totalorder %s21, 0
      %p43 = por %p41, %p42
      %s44 = ssub.s32 %s15, %s22
      %p45 = scmp.eq.s32.totalorder %s44, 0
      %s47 = sadd.s32 %s46, 1
      %s48 = scalar_select %p45, %s46, %s47
      %p51 = pneg %p45
      %p52 = scmp.eq.s32.totalorder %s15, 3
      %p53 = por %p51, %p52
      %p54 = scmp.ne.s32.totalorder %s46, %s49
      %p55 = scmp.eq.s32.totalorder %s15, 0
      %p56 = por %p54, %p55
      %p57 = scmp.ne.s32.totalorder %s46, %s49
      %p58 = scmp.eq.s32.totalorder %s20, 3
      %p59 = por %p57, %p58
      %p60 = scmp.ne.s32.totalorder %s49, %s50
      %p61 = scmp.eq.s32.totalorder %s20, 0
      %p62 = por %p60, %p61
      %p63 = scmp.ne.s32.totalorder %s49, %s50
      %p64 = scmp.eq.s32.totalorder %s21, 3
      %p65 = por %p63, %p64
      %p67 = scmp.ne.s32.totalorder %s50, %s66
      %p68 = scmp.eq.s32.totalorder %s21, 0
      %p69 = por %p67, %p68
      %s70 = ssub.s32 %s15, %s22
      %p71 = scmp.eq.s32.totalorder %s70, 0
      %s73 = sadd.s32 %s72, 1
      %s74 = scalar_select %p71, %s72, %s73
      %p77 = pneg %p71
      %p78 = scmp.eq.s32.totalorder %s15, 3
      %p79 = por %p77, %p78
      %p80 = scmp.ne.s32.totalorder %s72, %s75
      %p81 = scmp.eq.s32.totalorder %s15, 0
      %p82 = por %p80, %p81
      %p83 = scmp.ne.s32.totalorder %s72, %s75
      %p84 = scmp.eq.s32.totalorder %s20, 3
      %p85 = por %p83, %p84
      %p86 = scmp.ne.s32.totalorder %s75, %s76
      %p87 = scmp.eq.s32.totalorder %s20, 0
      %p88 = por %p86, %p87
      %p89 = scmp.ne.s32.totalorder %s75, %s76
      %p90 = scmp.eq.s32.totalorder %s21, 3
      %p91 = por %p89, %p90
      %p93 = scmp.ne.s32.totalorder %s76, %s92
      %p94 = scmp.eq.s32.totalorder %s21, 0
      %p95 = por %p93, %p94
      %p96 = scmp.le.s32.totalorder 1, %s15
      %p97 = scmp.lt.s32.totalorder %s15, 5
      %p98 = pnand %p96, %p97
      %p99 = pneg %p98
      // Predicated region
      $region9: #{tpu_custom_call.1} parent=5 // pred_check
        _
      $region10: #{tpu_custom_call.1} parent=5 // pred_check_branch
        %101 = sbr.rel (%p98) target = $region12
      $region11: #{tpu_custom_call.1} parent=5 // pred_region
        %s102 = ssub.s32 %s15, 1
        // Predicated region
        $region13: #{tpu_custom_call.1} parent=11 // pred_check
          %p103 = pneg %p36
        $region14: #{tpu_custom_call.1} parent=11 // pred_check_branch
          %105 = sbr.rel (%p103) target = $region16
        $region15: #{tpu_custom_call.1} parent=11 // pred_region
          _
        $region16: #{tpu_custom_call.1} parent=11 // pred_fallthru
          _
      $region12: #{tpu_custom_call.1} parent=5 // pred_fallthru
        _
      %p106 = scmp.lt.s32.totalorder %s15, 4
      // Predicated region
      $region17: #{tpu_custom_call.1} parent=5 // pred_check
        %p107 = pneg %p106
      $region18: #{tpu_custom_call.1} parent=5 // pred_check_branch
        %109 = sbr.rel (%p107) target = $region20
      $region19: #{tpu_custom_call.1} parent=5 // pred_region
        // Predicated region
        $region21: #{tpu_custom_call.1} parent=19 // pred_check
          %p110 = pneg %p56
        $region22: #{tpu_custom_call.1} parent=19 // pred_check_branch
          %112 = sbr.rel (%p110) target = $region24
        $region23: #{tpu_custom_call.1} parent=19 // pred_region
          %s113 = sand.u32 %s46, 1
          %s114 = scalar_lea.sflag [#allocation4], %s113
          %s115 = sand.u32 %s46, 1
          %s116 = smul.addr %s115, 256
          %s117 = scalar_lea.vmem [#allocation3], %s116
          %s118 = smul.u32 32, %s15
          %s120 = ssub.s32 4096, 4096
          %121 = vsyncadd %s114, %s120
          %s122 = smul.addr %s118, 128
          %s123 = scalar_lea.hbm %s1, %s122
          %s124 = sshll.u32 %s117, 4
          %s125 = int_to_ptr.vmem [resolvable:$true] %s124
          %130 = dma.hbm_to_vmem [thread:$0]  %s123, 4096, %s125, %s114, 128, 128, 8
        $region24: #{tpu_custom_call.1} parent=19 // pred_fallthru
          _
      $region20: #{tpu_custom_call.1} parent=5 // pred_fallthru
        _
      %p131 = scmp.le.s32.totalorder 1, %s15
      %p132 = scmp.lt.s32.totalorder %s15, 5
      %p133 = pnand %p131, %p132
      %p134 = pneg %p133
      // Predicated region
      $region25: #{tpu_custom_call.1} parent=5 // pred_check
        _
      $region26: #{tpu_custom_call.1} parent=5 // pred_check_branch
        %136 = sbr.rel (%p133) target = $region28
      $region27: #{tpu_custom_call.1} parent=5 // pred_region
        %s137 = ssub.s32 %s15, 1
        %s138 = sand.u32 %s49, 1
        %s139 = scalar_lea.sflag [#allocation4], %s138
        %s140 = sand.u32 %s49, 1
        %s141 = smul.addr %s140, 256
        %s142 = scalar_lea.vmem [#allocation3], %s141
        // Predicated region
        $region29: #{tpu_custom_call.1} parent=27 // pred_check
          %p143 = pneg %p62
        $region30: #{tpu_custom_call.1} parent=27 // pred_check_branch
          %145 = sbr.rel (%p143) target = $region32
        $region31: #{tpu_custom_call.1} parent=27 // pred_region
          %146 = dma.done %s139, 4096
        $region32: #{tpu_custom_call.1} parent=27 // pred_fallthru
          _
        %p147 = pneg %p36
        %p148 = pneg %p33
        %s149 = sand.u32 %s49, 1
        %s150 = scalar_lea.sflag [#allocation4], %s149
        %s151 = sand.u32 %s49, 1
        %s152 = smul.addr %s151, 256
        %s153 = scalar_lea.vmem [#allocation3], %s152
        %p154 = pneg %p62
        %p155 = pneg %p59
        %p156 = pneg %p88
        %p157 = pneg %p85
        %s158 = sand.u32 %s75, 1
        %s159 = scalar_lea.sflag [#allocation5], %s158
        %s160 = sand.u32 %s75, 1
        %s161 = smul.addr %s160, 512
        %s162 = scalar_lea.vmem [#allocation6], %s161
        %s163 = smul.u32 32, %s20
        %s164 = smul.u32 32, %s20
        %v165 = vld [vmem:[%s142] sm:$0xff]
        %v166 = vld [vmem:[%s142 + $0x8] sm:$0xff]
        %v167 = vld [vmem:[%s142 + $0x10] sm:$0xff]
        %v168 = vld [vmem:[%s142 + $0x18] sm:$0xff]
        %v169 = vld [vmem:[%s142 + $0x20] sm:$0xff]
        %v170 = vld [vmem:[%s142 + $0x28] sm:$0xff]
        %v171 = vld [vmem:[%s142 + $0x30] sm:$0xff]
        %v172 = vld [vmem:[%s142 + $0x38] sm:$0xff]
        %v173 = vld [vmem:[%s142 + $0x40] sm:$0xff]
        %v174 = vld [vmem:[%s142 + $0x48] sm:$0xff]
        %v175 = vld [vmem:[%s142 + $0x50] sm:$0xff]
        %v176 = vld [vmem:[%s142 + $0x58] sm:$0xff]
        %v177 = vld [vmem:[%s142 + $0x60] sm:$0xff]
        %v178 = vld [vmem:[%s142 + $0x68] sm:$0xff]
        %v179 = vld [vmem:[%s142 + $0x70] sm:$0xff]
        %v180 = vld [vmem:[%s142 + $0x78] sm:$0xff]
        %v181 = vld [vmem:[%s142 + $0x80] sm:$0xff]
        %v182 = vld [vmem:[%s142 + $0x88] sm:$0xff]
        %v183 = vld [vmem:[%s142 + $0x90] sm:$0xff]
        %v184 = vld [vmem:[%s142 + $0x98] sm:$0xff]
        %v185 = vld [vmem:[%s142 + $0xa0] sm:$0xff]
        %v186 = vld [vmem:[%s142 + $0xa8] sm:$0xff]
        %v187 = vld [vmem:[%s142 + $0xb0] sm:$0xff]
        %v188 = vld [vmem:[%s142 + $0xb8] sm:$0xff]
        %v189 = vld [vmem:[%s142 + $0xc0] sm:$0xff]
        %v190 = vld [vmem:[%s142 + $0xc8] sm:$0xff]
        %v191 = vld [vmem:[%s142 + $0xd0] sm:$0xff]
        %v192 = vld [vmem:[%s142 + $0xd8] sm:$0xff]
        %v193 = vld [vmem:[%s142 + $0xe0] sm:$0xff]
        %v194 = vld [vmem:[%s142 + $0xe8] sm:$0xff]
        %v195 = vld [vmem:[%s142 + $0xf0] sm:$0xff]
        %v196 = vld [vmem:[%s142 + $0xf8] sm:$0xff]
        %vm197 = vcmp.eq.f32.partialorder %v165, 0.0
        %vm198 = vcmp.eq.f32.partialorder %v166, 0.0
        %vm199 = vcmp.eq.f32.partialorder %v167, 0.0
        %vm200 = vcmp.eq.f32.partialorder %v168, 0.0
        %vm201 = vcmp.eq.f32.partialorder %v169, 0.0
        %vm202 = vcmp.eq.f32.partialorder %v170, 0.0
        %vm203 = vcmp.eq.f32.partialorder %v171, 0.0
        %vm204 = vcmp.eq.f32.partialorder %v172, 0.0
        %vm205 = vcmp.eq.f32.partialorder %v173, 0.0
        %vm206 = vcmp.eq.f32.partialorder %v174, 0.0
        %vm207 = vcmp.eq.f32.partialorder %v175, 0.0
        %vm208 = vcmp.eq.f32.partialorder %v176, 0.0
        %vm209 = vcmp.eq.f32.partialorder %v177, 0.0
        %vm210 = vcmp.eq.f32.partialorder %v178, 0.0
        %vm211 = vcmp.eq.f32.partialorder %v179, 0.0
        %vm212 = vcmp.eq.f32.partialorder %v180, 0.0
        %vm213 = vcmp.eq.f32.partialorder %v181, 0.0
        %vm214 = vcmp.eq.f32.partialorder %v182, 0.0
        %vm215 = vcmp.eq.f32.partialorder %v183, 0.0
        %vm216 = vcmp.eq.f32.partialorder %v184, 0.0
        %vm217 = vcmp.eq.f32.partialorder %v185, 0.0
        %vm218 = vcmp.eq.f32.partialorder %v186, 0.0
        %vm219 = vcmp.eq.f32.partialorder %v187, 0.0
        %vm220 = vcmp.eq.f32.partialorder %v188, 0.0
        %vm221 = vcmp.eq.f32.partialorder %v189, 0.0
        %vm222 = vcmp.eq.f32.partialorder %v190, 0.0
        %vm223 = vcmp.eq.f32.partialorder %v191, 0.0
        %vm224 = vcmp.eq.f32.partialorder %v192, 0.0
        %vm225 = vcmp.eq.f32.partialorder %v193, 0.0
        %vm226 = vcmp.eq.f32.partialorder %v194, 0.0
        %vm227 = vcmp.eq.f32.partialorder %v195, 0.0
        %vm228 = vcmp.eq.f32.partialorder %v196, 0.0
        %v229 = vsel %vm197, -1.0, %v165
        %v230 = vsel %vm198, -1.0, %v166
        %v231 = vsel %vm199, -1.0, %v167
        %v232 = vsel %vm200, -1.0, %v168
        %v233 = vsel %vm201, -1.0, %v169
        %v234 = vsel %vm202, -1.0, %v170
        %v235 = vsel %vm203, -1.0, %v171
        %v236 = vsel %vm204, -1.0, %v172
        %v237 = vsel %vm205, -1.0, %v173
        %v238 = vsel %vm206, -1.0, %v174
        %v239 = vsel %vm207, -1.0, %v175
        %v240 = vsel %vm208, -1.0, %v176
        %v241 = vsel %vm209, -1.0, %v177
        %v242 = vsel %vm210, -1.0, %v178
        %v243 = vsel %vm211, -1.0, %v179
        %v244 = vsel %vm212, -1.0, %v180
        %v245 = vsel %vm213, -1.0, %v181
        %v246 = vsel %vm214, -1.0, %v182
        %v247 = vsel %vm215, -1.0, %v183
        %v248 = vsel %vm216, -1.0, %v184
        %v249 = vsel %vm217, -1.0, %v185
        %v250 = vsel %vm218, -1.0, %v186
        %v251 = vsel %vm219, -1.0, %v187
        %v252 = vsel %vm220, -1.0, %v188
        %v253 = vsel %vm221, -1.0, %v189
        %v254 = vsel %vm222, -1.0, %v190
        %v255 = vsel %vm223, -1.0, %v191
        %v256 = vsel %vm224, -1.0, %v192
        %v257 = vsel %vm225, -1.0, %v193
        %v258 = vsel %vm226, -1.0, %v194
        %v259 = vsel %vm227, -1.0, %v195
        %v260 = vsel %vm228, -1.0, %v196
        %s261 = sld [smem:[#allocation2]]
        %v262 = vstv %s261
        %v263 = vmul.f32 %v262, %v229
        %v264 = vmul.f32 %v262, %v230
        %v265 = vmul.f32 %v262, %v231
        %v266 = vmul.f32 %v262, %v232
        %v267 = vmul.f32 %v262, %v233
        %v268 = vmul.f32 %v262, %v234
        %v269 = vmul.f32 %v262, %v235
        %v270 = vmul.f32 %v262, %v236
        %v271 = vmul.f32 %v262, %v237
        %v272 = vmul.f32 %v262, %v238
        %v273 = vmul.f32 %v262, %v239
        %v274 = vmul.f32 %v262, %v240
        %v275 = vmul.f32 %v262, %v241
        %v276 = vmul.f32 %v262, %v242
        %v277 = vmul.f32 %v262, %v243
        %v278 = vmul.f32 %v262, %v244
        %v279 = vmul.f32 %v262, %v245
        %v280 = vmul.f32 %v262, %v246
        %v281 = vmul.f32 %v262, %v247
        %v282 = vmul.f32 %v262, %v248
        %v283 = vmul.f32 %v262, %v249
        %v284 = vmul.f32 %v262, %v250
        %v285 = vmul.f32 %v262, %v251
        %v286 = vmul.f32 %v262, %v252
        %v287 = vmul.f32 %v262, %v253
        %v288 = vmul.f32 %v262, %v254
        %v289 = vmul.f32 %v262, %v255
        %v290 = vmul.f32 %v262, %v256
        %v291 = vmul.f32 %v262, %v257
        %v292 = vmul.f32 %v262, %v258
        %v293 = vmul.f32 %v262, %v259
        %v294 = vmul.f32 %v262, %v260
        %v295 = vmul.f32 %v263, 0.5
        %v296 = vmul.f32 %v264, 0.5
        %v297 = vmul.f32 %v265, 0.5
        %v298 = vmul.f32 %v266, 0.5
        %v299 = vmul.f32 %v267, 0.5
        %v300 = vmul.f32 %v268, 0.5
        %v301 = vmul.f32 %v269, 0.5
        %v302 = vmul.f32 %v270, 0.5
        %v303 = vmul.f32 %v271, 0.5
        %v304 = vmul.f32 %v272, 0.5
        %v305 = vmul.f32 %v273, 0.5
        %v306 = vmul.f32 %v274, 0.5
        %v307 = vmul.f32 %v275, 0.5
        %v308 = vmul.f32 %v276, 0.5
        %v309 = vmul.f32 %v277, 0.5
        %v310 = vmul.f32 %v278, 0.5
        %v311 = vmul.f32 %v279, 0.5
        %v312 = vmul.f32 %v280, 0.5
        %v313 = vmul.f32 %v281, 0.5
        %v314 = vmul.f32 %v282, 0.5
        %v315 = vmul.f32 %v283, 0.5
        %v316 = vmul.f32 %v284, 0.5
        %v317 = vmul.f32 %v285, 0.5
        %v318 = vmul.f32 %v286, 0.5
        %v319 = vmul.f32 %v287, 0.5
        %v320 = vmul.f32 %v288, 0.5
        %v321 = vmul.f32 %v289, 0.5
        %v322 = vmul.f32 %v290, 0.5
        %v323 = vmul.f32 %v291, 0.5
        %v324 = vmul.f32 %v292, 0.5
        %v325 = vmul.f32 %v293, 0.5
        %v326 = vmul.f32 %v294, 0.5
        %v327 = vtanh.pop %v295
        %v328 = vtanh.pop %v296
        %v329 = vtanh.pop %v297
        %v330 = vtanh.pop %v298
        %v331 = vtanh.pop %v299
        %v332 = vtanh.pop %v300
        %v333 = vtanh.pop %v301
        %v334 = vtanh.pop %v302
        %v335 = vtanh.pop %v303
        %v336 = vtanh.pop %v304
        %v337 = vtanh.pop %v305
        %v338 = vtanh.pop %v306
        %v339 = vtanh.pop %v307
        %v340 = vtanh.pop %v308
        %v341 = vtanh.pop %v309
        %v342 = vtanh.pop %v310
        %v343 = vtanh.pop %v311
        %v344 = vtanh.pop %v312
        %v345 = vtanh.pop %v313
        %v346 = vtanh.pop %v314
        %v347 = vtanh.pop %v315
        %v348 = vtanh.pop %v316
        %v349 = vtanh.pop %v317
        %v350 = vtanh.pop %v318
        %v351 = vtanh.pop %v319
        %v352 = vtanh.pop %v320
        %v353 = vtanh.pop %v321
        %v354 = vtanh.pop %v322
        %v355 = vtanh.pop %v323
        %v356 = vtanh.pop %v324
        %v357 = vtanh.pop %v325
        %v358 = vtanh.pop %v326
        %v359 = vmul.f32 %v327, 0.5
        %v360 = vmul.f32 %v328, 0.5
        %v361 = vmul.f32 %v329, 0.5
        %v362 = vmul.f32 %v330, 0.5
        %v363 = vmul.f32 %v331, 0.5
        %v364 = vmul.f32 %v332, 0.5
        %v365 = vmul.f32 %v333, 0.5
        %v366 = vmul.f32 %v334, 0.5
        %v367 = vmul.f32 %v335, 0.5
        %v368 = vmul.f32 %v336, 0.5
        %v369 = vmul.f32 %v337, 0.5
        %v370 = vmul.f32 %v338, 0.5
        %v371 = vmul.f32 %v339, 0.5
        %v372 = vmul.f32 %v340, 0.5
        %v373 = vmul.f32 %v341, 0.5
        %v374 = vmul.f32 %v342, 0.5
        %v375 = vmul.f32 %v343, 0.5
        %v376 = vmul.f32 %v344, 0.5
        %v377 = vmul.f32 %v345, 0.5
        %v378 = vmul.f32 %v346, 0.5
        %v379 = vmul.f32 %v347, 0.5
        %v380 = vmul.f32 %v348, 0.5
        %v381 = vmul.f32 %v349, 0.5
        %v382 = vmul.f32 %v350, 0.5
        %v383 = vmul.f32 %v351, 0.5
        %v384 = vmul.f32 %v352, 0.5
        %v385 = vmul.f32 %v353, 0.5
        %v386 = vmul.f32 %v354, 0.5
        %v387 = vmul.f32 %v355, 0.5
        %v388 = vmul.f32 %v356, 0.5
        %v389 = vmul.f32 %v357, 0.5
        %v390 = vmul.f32 %v358, 0.5
        %v391 = vadd.f32 %v359, 0.5
        %v392 = vadd.f32 %v360, 0.5
        %v393 = vadd.f32 %v361, 0.5
        %v394 = vadd.f32 %v362, 0.5
        %v395 = vadd.f32 %v363, 0.5
        %v396 = vadd.f32 %v364, 0.5
        %v397 = vadd.f32 %v365, 0.5
        %v398 = vadd.f32 %v366, 0.5
        %v399 = vadd.f32 %v367, 0.5
        %v400 = vadd.f32 %v368, 0.5
        %v401 = vadd.f32 %v369, 0.5
        %v402 = vadd.f32 %v370, 0.5
        %v403 = vadd.f32 %v371, 0.5
        %v404 = vadd.f32 %v372, 0.5
        %v405 = vadd.f32 %v373, 0.5
        %v406 = vadd.f32 %v374, 0.5
        %v407 = vadd.f32 %v375, 0.5
        %v408 = vadd.f32 %v376, 0.5
        %v409 = vadd.f32 %v377, 0.5
        %v410 = vadd.f32 %v378, 0.5
        %v411 = vadd.f32 %v379, 0.5
        %v412 = vadd.f32 %v380, 0.5
        %v413 = vadd.f32 %v381, 0.5
        %v414 = vadd.f32 %v382, 0.5
        %v415 = vadd.f32 %v383, 0.5
        %v416 = vadd.f32 %v384, 0.5
        %v417 = vadd.f32 %v385, 0.5
        %v418 = vadd.f32 %v386, 0.5
        %v419 = vadd.f32 %v387, 0.5
        %v420 = vadd.f32 %v388, 0.5
        %v421 = vadd.f32 %v389, 0.5
        %v422 = vadd.f32 %v390, 0.5
        %v423 = vmul.f32 %v391, 0.0078125
        %v424 = vmul.f32 %v392, 0.0078125
        %v425 = vmul.f32 %v393, 0.0078125
        %v426 = vmul.f32 %v394, 0.0078125
        %v427 = vmul.f32 %v395, 0.0078125
        %v428 = vmul.f32 %v396, 0.0078125
        %v429 = vmul.f32 %v397, 0.0078125
        %v430 = vmul.f32 %v398, 0.0078125
        %v431 = vmul.f32 %v399, 0.0078125
        %v432 = vmul.f32 %v400, 0.0078125
        %v433 = vmul.f32 %v401, 0.0078125
        %v434 = vmul.f32 %v402, 0.0078125
        %v435 = vmul.f32 %v403, 0.0078125
        %v436 = vmul.f32 %v404, 0.0078125
        %v437 = vmul.f32 %v405, 0.0078125
        %v438 = vmul.f32 %v406, 0.0078125
        %v439 = vmul.f32 %v407, 0.0078125
        %v440 = vmul.f32 %v408, 0.0078125
        %v441 = vmul.f32 %v409, 0.0078125
        %v442 = vmul.f32 %v410, 0.0078125
        %v443 = vmul.f32 %v411, 0.0078125
        %v444 = vmul.f32 %v412, 0.0078125
        %v445 = vmul.f32 %v413, 0.0078125
        %v446 = vmul.f32 %v414, 0.0078125
        %v447 = vmul.f32 %v415, 0.0078125
        %v448 = vmul.f32 %v416, 0.0078125
        %v449 = vmul.f32 %v417, 0.0078125
        %v450 = vmul.f32 %v418, 0.0078125
        %v451 = vmul.f32 %v419, 0.0078125
        %v452 = vmul.f32 %v420, 0.0078125
        %v453 = vmul.f32 %v421, 0.0078125
        %v454 = vmul.f32 %v422, 0.0078125
        %455 = vst [vmem:[%s162] sm:$0xff] %v423
        %456 = vst [vmem:[%s162 + $0x10] sm:$0xff] %v424
        %457 = vst [vmem:[%s162 + $0x20] sm:$0xff] %v425
        %458 = vst [vmem:[%s162 + $0x30] sm:$0xff] %v426
        %459 = vst [vmem:[%s162 + $0x40] sm:$0xff] %v427
        %460 = vst [vmem:[%s162 + $0x50] sm:$0xff] %v428
        %461 = vst [vmem:[%s162 + $0x60] sm:$0xff] %v429
        %462 = vst [vmem:[%s162 + $0x70] sm:$0xff] %v430
        %463 = vst [vmem:[%s162 + $0x80] sm:$0xff] %v431
        %464 = vst [vmem:[%s162 + $0x90] sm:$0xff] %v432
        %465 = vst [vmem:[%s162 + $0xa0] sm:$0xff] %v433
        %466 = vst [vmem:[%s162 + $0xb0] sm:$0xff] %v434
        %467 = vst [vmem:[%s162 + $0xc0] sm:$0xff] %v435
        %468 = vst [vmem:[%s162 + $0xd0] sm:$0xff] %v436
        %469 = vst [vmem:[%s162 + $0xe0] sm:$0xff] %v437
        %470 = vst [vmem:[%s162 + $0xf0] sm:$0xff] %v438
        %471 = vst [vmem:[%s162 + $0x100] sm:$0xff] %v439
        %472 = vst [vmem:[%s162 + $0x110] sm:$0xff] %v440
        %473 = vst [vmem:[%s162 + $0x120] sm:$0xff] %v441
        %474 = vst [vmem:[%s162 + $0x130] sm:$0xff] %v442
        %475 = vst [vmem:[%s162 + $0x140] sm:$0xff] %v443
        %476 = vst [vmem:[%s162 + $0x150] sm:$0xff] %v444
        %477 = vst [vmem:[%s162 + $0x160] sm:$0xff] %v445
        %478 = vst [vmem:[%s162 + $0x170] sm:$0xff] %v446
        %479 = vst [vmem:[%s162 + $0x180] sm:$0xff] %v447
        %480 = vst [vmem:[%s162 + $0x190] sm:$0xff] %v448
        %481 = vst [vmem:[%s162 + $0x1a0] sm:$0xff] %v449
        %482 = vst [vmem:[%s162 + $0x1b0] sm:$0xff] %v450
        %483 = vst [vmem:[%s162 + $0x1c0] sm:$0xff] %v451
        %484 = vst [vmem:[%s162 + $0x1d0] sm:$0xff] %v452
        %485 = vst [vmem:[%s162 + $0x1e0] sm:$0xff] %v453
        %486 = vst [vmem:[%s162 + $0x1f0] sm:$0xff] %v454
        %v487 = vsub.f32 1.0, %v391
        %v488 = vsub.f32 1.0, %v392
        %v489 = vsub.f32 1.0, %v393
        %v490 = vsub.f32 1.0, %v394
        %v491 = vsub.f32 1.0, %v395
        %v492 = vsub.f32 1.0, %v396
        %v493 = vsub.f32 1.0, %v397
        %v494 = vsub.f32 1.0, %v398
        %v495 = vsub.f32 1.0, %v399
        %v496 = vsub.f32 1.0, %v400
        %v497 = vsub.f32 1.0, %v401
        %v498 = vsub.f32 1.0, %v402
        %v499 = vsub.f32 1.0, %v403
        %v500 = vsub.f32 1.0, %v404
        %v501 = vsub.f32 1.0, %v405
        %v502 = vsub.f32 1.0, %v406
        %v503 = vsub.f32 1.0, %v407
        %v504 = vsub.f32 1.0, %v408
        %v505 = vsub.f32 1.0, %v409
        %v506 = vsub.f32 1.0, %v410
        %v507 = vsub.f32 1.0, %v411
        %v508 = vsub.f32 1.0, %v412
        %v509 = vsub.f32 1.0, %v413
        %v510 = vsub.f32 1.0, %v414
        %v511 = vsub.f32 1.0, %v415
        %v512 = vsub.f32 1.0, %v416
        %v513 = vsub.f32 1.0, %v417
        %v514 = vsub.f32 1.0, %v418
        %v515 = vsub.f32 1.0, %v419
        %v516 = vsub.f32 1.0, %v420
        %v517 = vsub.f32 1.0, %v421
        %v518 = vsub.f32 1.0, %v422
        %v519 = vmul.f32 %v487, 0.0078125
        %v520 = vmul.f32 %v488, 0.0078125
        %v521 = vmul.f32 %v489, 0.0078125
        %v522 = vmul.f32 %v490, 0.0078125
        %v523 = vmul.f32 %v491, 0.0078125
        %v524 = vmul.f32 %v492, 0.0078125
        %v525 = vmul.f32 %v493, 0.0078125
        %v526 = vmul.f32 %v494, 0.0078125
        %v527 = vmul.f32 %v495, 0.0078125
        %v528 = vmul.f32 %v496, 0.0078125
        %v529 = vmul.f32 %v497, 0.0078125
        %v530 = vmul.f32 %v498, 0.0078125
        %v531 = vmul.f32 %v499, 0.0078125
        %v532 = vmul.f32 %v500, 0.0078125
        %v533 = vmul.f32 %v501, 0.0078125
        %v534 = vmul.f32 %v502, 0.0078125
        %v535 = vmul.f32 %v503, 0.0078125
        %v536 = vmul.f32 %v504, 0.0078125
        %v537 = vmul.f32 %v505, 0.0078125
        %v538 = vmul.f32 %v506, 0.0078125
        %v539 = vmul.f32 %v507, 0.0078125
        %v540 = vmul.f32 %v508, 0.0078125
        %v541 = vmul.f32 %v509, 0.0078125
        %v542 = vmul.f32 %v510, 0.0078125
        %v543 = vmul.f32 %v511, 0.0078125
        %v544 = vmul.f32 %v512, 0.0078125
        %v545 = vmul.f32 %v513, 0.0078125
        %v546 = vmul.f32 %v514, 0.0078125
        %v547 = vmul.f32 %v515, 0.0078125
        %v548 = vmul.f32 %v516, 0.0078125
        %v549 = vmul.f32 %v517, 0.0078125
        %v550 = vmul.f32 %v518, 0.0078125
        %551 = vst [vmem:[%s162 + $0x8] sm:$0xff] %v519
        %552 = vst [vmem:[%s162 + $0x18] sm:$0xff] %v520
        %553 = vst [vmem:[%s162 + $0x28] sm:$0xff] %v521
        %554 = vst [vmem:[%s162 + $0x38] sm:$0xff] %v522
        %555 = vst [vmem:[%s162 + $0x48] sm:$0xff] %v523
        %556 = vst [vmem:[%s162 + $0x58] sm:$0xff] %v524
        %557 = vst [vmem:[%s162 + $0x68] sm:$0xff] %v525
        %558 = vst [vmem:[%s162 + $0x78] sm:$0xff] %v526
        %559 = vst [vmem:[%s162 + $0x88] sm:$0xff] %v527
        %560 = vst [vmem:[%s162 + $0x98] sm:$0xff] %v528
        %561 = vst [vmem:[%s162 + $0xa8] sm:$0xff] %v529
        %562 = vst [vmem:[%s162 + $0xb8] sm:$0xff] %v530
        %563 = vst [vmem:[%s162 + $0xc8] sm:$0xff] %v531
        %564 = vst [vmem:[%s162 + $0xd8] sm:$0xff] %v532
        %565 = vst [vmem:[%s162 + $0xe8] sm:$0xff] %v533
        %566 = vst [vmem:[%s162 + $0xf8] sm:$0xff] %v534
        %567 = vst [vmem:[%s162 + $0x108] sm:$0xff] %v535
        %568 = vst [vmem:[%s162 + $0x118] sm:$0xff] %v536
        %569 = vst [vmem:[%s162 + $0x128] sm:$0xff] %v537
        %570 = vst [vmem:[%s162 + $0x138] sm:$0xff] %v538
        %571 = vst [vmem:[%s162 + $0x148] sm:$0xff] %v539
        %572 = vst [vmem:[%s162 + $0x158] sm:$0xff] %v540
        %573 = vst [vmem:[%s162 + $0x168] sm:$0xff] %v541
        %574 = vst [vmem:[%s162 + $0x178] sm:$0xff] %v542
        %575 = vst [vmem:[%s162 + $0x188] sm:$0xff] %v543
        %576 = vst [vmem:[%s162 + $0x198] sm:$0xff] %v544
        %577 = vst [vmem:[%s162 + $0x1a8] sm:$0xff] %v545
        %578 = vst [vmem:[%s162 + $0x1b8] sm:$0xff] %v546
        %579 = vst [vmem:[%s162 + $0x1c8] sm:$0xff] %v547
        %580 = vst [vmem:[%s162 + $0x1d8] sm:$0xff] %v548
        %581 = vst [vmem:[%s162 + $0x1e8] sm:$0xff] %v549
        %582 = vst [vmem:[%s162 + $0x1f8] sm:$0xff] %v550
        %s583 = sand.u32 %s75, 1
        %s584 = scalar_lea.sflag [#allocation5], %s583
        %s585 = sand.u32 %s75, 1
        %s586 = smul.addr %s585, 512
        %s587 = scalar_lea.vmem [#allocation6], %s586
        // Predicated region
        $region33: #{tpu_custom_call.1} parent=27 // pred_check
          %p588 = pneg %p85
        $region34: #{tpu_custom_call.1} parent=27 // pred_check_branch
          %590 = sbr.rel (%p588) target = $region36
        $region35: #{tpu_custom_call.1} parent=27 // pred_region
          %s591 = smul.u32 32, %s20
          %s593 = ssub.s32 8192, 8192
          %594 = vsyncadd %s584, %s593
          %s595 = smul.addr %s591, 2
          %s596 = smul.addr %s595, 128
          %s597 = scalar_lea.hbm %s2, %s596
          %s598 = sshll.u32 %s587, 4
          %s599 = int_to_ptr.vmem [resolvable:$true] %s598
          %604 = dma.vmem_to_hbm [thread:$0]  %s599, 8192, %s597, %s584, 256, 256, 16
        $region36: #{tpu_custom_call.1} parent=27 // pred_fallthru
          _
      $region28: #{tpu_custom_call.1} parent=5 // pred_fallthru
        _
      %p605 = scmp.le.s32.totalorder 2, %s15
      // Predicated region
      $region37: #{tpu_custom_call.1} parent=5 // pred_check
        %p606 = pneg %p605
      $region38: #{tpu_custom_call.1} parent=5 // pred_check_branch
        %608 = sbr.rel (%p606) target = $region40
      $region39: #{tpu_custom_call.1} parent=5 // pred_region
        %s609 = ssub.s32 %s15, 2
        // Predicated region
        $region41: #{tpu_custom_call.1} parent=39 // pred_check
          %p610 = pneg %p91
        $region42: #{tpu_custom_call.1} parent=39 // pred_check_branch
          %612 = sbr.rel (%p610) target = $region44
        $region43: #{tpu_custom_call.1} parent=39 // pred_region
          %s613 = sand.u32 %s76, 1
          %s614 = scalar_lea.sflag [#allocation5], %s613
          %s615 = sand.u32 %s76, 1
          %s616 = smul.addr %s615, 512
          %s617 = scalar_lea.vmem [#allocation6], %s616
          %618 = dma.done %s614, 8192
        $region44: #{tpu_custom_call.1} parent=39 // pred_fallthru
          _
      $region40: #{tpu_custom_call.1} parent=5 // pred_fallthru
        _
    $region6: #{tpu_custom_call.1} parent=1 // loop_footer
      %s19 = sadd.s32 1, %s15
    $region7: #{tpu_custom_call.1} parent=1 // loop_footer_branch
      %14 = sbr.rel target = $region3
    $region8: #{tpu_custom_call.1} parent=1 // loop_exit
      _
    %619 = vsyncpa [#allocation4], 1
    %s620 = scalar_lea.sflag [#allocation4], 1
    %621 = vsyncpa %s620, 1
    %622 = vsyncpa [#allocation5], 1
    %s623 = scalar_lea.sflag [#allocation5], 1
    %624 = vsyncpa %s623, 1

</llo_original>
